<compile_context>
chip_gen: v6e
topology: v6e:2x2x1
jax: 0.10.0
libtpu: 0.0.40
codegen_flags: <defaults>
</compile_context>

<pallas_src>
import functools

import jax
import jax.numpy as jnp
import numpy as np
from jax.experimental import pallas as pl
from jax.experimental.pallas import tpu as pltpu

NEG_SLOPE = 0.01   # nn.LeakyReLU default
EPS = 1e-5         # nn.InstanceNorm2d default


def _leaky(z):
    return jnp.where(z >= 0, z, NEG_SLOPE * z)


def basic_conv_block_kernel(xt_ref, wf_ref, w2_ref, p_ref, m_ref, o_ref,
                            *, H, W, B, Co):
    """One block of B samples per grid step.

    xt_ref: (Cip, B*HW)   lane = b*HW + (h*W + w), channels padded to 8
    wf_ref: (2*Co, 9*Cip) conv1 weight stacked over residual-1x1 weight
    w2_ref: (Co, 9*Co)    conv2 weight
    p_ref : (2*Co, 4)     packed affine params
    m_ref : (9, B*HW)     precomputed border masks (grid-invariant)
    o_ref : (Co, B*HW)
    """
    HW = H * W
    L = B * HW
    inv_hw = 1.0 / float(HW)

    masks = m_ref[...]                                     # (9, L)

    def build_patch(z):
        # z: (C, L), C a multiple of 8.  9 shifted+masked taps stacked on the
        # sublane axis -> (9*C, L).  Rolls run on the XLU; concat pieces are
        # 8-sublane aligned, so no masked sub-tile stores are generated.
        taps = []
        j = 0
        for dh in (-1, 0, 1):
            for dw in (-1, 0, 1):
                s = dh * W + dw
                t = z if s == 0 else pltpu.roll(z, shift=(-s) % L, axis=1)
                if j != 4:                                 # center tap needs no mask
                    t = t * masks[j:j + 1, :]
                taps.append(t)
                j += 1
        return jnp.concatenate(taps, axis=0)

    def instance_norm(z, g, b):
        # Per-sample, per-channel norm.  z: (C, B*HW); g, b: (C, 1).
        # Two-pass variance for accuracy; each per-sample segment is a
        # 128-aligned lane slice so slicing / concat stay lane-aligned.
        parts = []
        for bb in range(B):
            seg = z[:, bb * HW:(bb + 1) * HW]
            mean = jnp.sum(seg, axis=1, keepdims=True) * inv_hw
            d = seg - mean
            var = jnp.sum(d * d, axis=1, keepdims=True) * inv_hw
            parts.append(d * (g * jax.lax.rsqrt(var + EPS)) + b)
        return parts[0] if B == 1 else jnp.concatenate(parts, axis=1)

    xt = xt_ref[...]                                       # (Cip, L)

    # Fused conv1(3x3) + residual conv1x1: ONE MXU matmul with M = 2*Co.
    pre = jnp.dot(wf_ref[...], build_patch(xt),
                  preferred_element_type=jnp.float32)      # (2*Co, L)

    # One InstanceNorm over the stacked block: rows [0,Co) = conv1 branch,
    # rows [Co,2Co) = residual branch (per-channel stats are independent).
    normed = instance_norm(pre, p_ref[:, 0:1], p_ref[:, 1:2])
    y = _leaky(normed[:Co, :])                             # conv1 -> IN -> LeakyReLU
    r = normed[Co:, :]                                     # residual: 1x1 -> IN

    # conv2(3x3) -> InstanceNorm (no activation)
    y2 = jnp.dot(w2_ref[...], build_patch(y),
                 preferred_element_type=jnp.float32)       # (Co, L)
    y2 = instance_norm(y2, p_ref[:Co, 2:3], p_ref[:Co, 3:4])

    # drop_path(p=0.0) is the identity.
    # TODO(synk): stochastic DropPath (p > 0) not implemented; p=0.0 per module default.
    o_ref[...] = _leaky(y2 + r).astype(o_ref.dtype)


def _border_masks(H, W, B):
    """(9, B*HW) f32 masks implementing 1-pixel zero padding; tiled over B."""
    hw = H * W
    idx = np.arange(hw)
    h, w = idx // W, idx % W
    rows = []
    for dh in (-1, 0, 1):
        for dw in (-1, 0, 1):
            m = np.ones(hw, np.float32)
            if dh < 0:
                m = m * (h >= -dh)
            elif dh > 0:
                m = m * (h < H - dh)
            if dw < 0:
                m = m * (w >= -dw)
            elif dw > 0:
                m = m * (w < W - dw)
            rows.append(m.astype(np.float32))
    return np.tile(np.stack(rows), (1, B)).astype(np.float32)


def _pick_samples_per_step(n, max_b=8):
    b = min(n, max_b)
    while n % b:
        b -= 1
    return b


def basic_conv_block(x_nchw, params, samples_per_step=None):
    """x_nchw: (N, Cin, H, W) float32 -> (N, Cout, H, W) float32."""
    N, Ci, H, W = x_nchw.shape
    Co = params["w1"].shape[-1]
    HW = H * W
    B = _pick_samples_per_step(N) if samples_per_step is None else samples_per_step
    nb = N // B
    L = B * HW
    Cip = ((Ci + 7) // 8) * 8          # pad input channels to a full sublane group

    # Lane-batched activation layout: (nb, Cip, B*HW), lane = b*HW + p.
    xt = x_nchw.reshape(nb, B, Ci, HW).transpose(0, 2, 1, 3).reshape(nb, Ci, L)
    if Cip != Ci:
        xt = jnp.pad(xt, ((0, 0), (0, Cip - Ci), (0, 0)))

    # conv1 weight -> (Co, 9*Cip), column = tap*Cip + ci   (tap = kh*3 + kw)
    w1t = jnp.transpose(params["w1"], (3, 0, 1, 2))                # (Co, 3, 3, Ci)
    w1t = jnp.pad(w1t, ((0, 0), (0, 0), (0, 0), (0, Cip - Ci))).reshape(Co, 9 * Cip)
    # Residual 1x1 weight folded into the same matmul via the center-tap columns.
    wrt = jnp.transpose(params["wr"], (1, 0))                      # (Co, Ci)
    wr_rows = jnp.zeros((Co, 9 * Cip), jnp.float32)
    wr_rows = wr_rows.at[:, 4 * Cip:4 * Cip + Ci].set(wrt)
    wf = jnp.concatenate([w1t, wr_rows], axis=0)                   # (2*Co, 9*Cip)

    w2t = jnp.transpose(params["w2"], (3, 0, 1, 2)).reshape(Co, 9 * Co)

    # All six affine params packed into ONE (2*Co, 4) block:
    #   col0/col1 = scale/shift for the fused conv1+residual InstanceNorm,
    #   col2/col3 = scale/shift for conv2's InstanceNorm (first Co rows used).
    zero = jnp.zeros((Co,), jnp.float32)
    p_packed = jnp.stack([
        jnp.concatenate([params["g1"], params["gr"]]),
        jnp.concatenate([params["b1"], params["br"]]),
        jnp.concatenate([params["g2"], zero]),
        jnp.concatenate([params["b2"], zero]),
    ], axis=1)                                                     # (2*Co, 4)

    masks = jnp.asarray(_border_masks(H, W, B))                    # (9, L)

    kernel = functools.partial(basic_conv_block_kernel, H=H, W=W, B=B, Co=Co)

    def rep(shape):
        return pl.BlockSpec(shape, lambda i: (0,) * len(shape))

    out = pl.pallas_call(
        kernel,
        out_shape=jax.ShapeDtypeStruct((nb, Co, L), jnp.float32),
        grid=(nb,),
        in_specs=[
            pl.BlockSpec((None, Cip, L), lambda i: (i, 0, 0)),     # activations
            rep((2 * Co, 9 * Cip)),                                # fused conv1+res weight
            rep((Co, 9 * Co)),                                     # conv2 weight
            rep((2 * Co, 4)),                                      # packed affine params
            rep((9, L)),                                           # precomputed border masks
        ],
        out_specs=pl.BlockSpec((None, Co, L), lambda i: (i, 0, 0)),
        compiler_params=pltpu.CompilerParams(
            dimension_semantics=("parallel",)),
    )(xt, wf, w2t, p_packed, masks)

    # Undo the lane-batched layout (cheap at these sizes, outside the kernel).
    return out.reshape(nb, Co, B, HW).transpose(0, 2, 1, 3).reshape(N, Co, H, W)


def reference_forward(x_nchw, params):
    """Pure-JAX reference (NCHW, lax.conv) for validation."""
    def conv3x3(x, w_khwcico):
        w = jnp.transpose(w_khwcico, (3, 2, 0, 1))  # -> OIHW
        return jax.lax.conv_general_dilated(
            x, w, window_strides=(1, 1), padding=[(1, 1), (1, 1)],
            dimension_numbers=("NCHW", "OIHW", "NCHW"))

    def inorm(x, g, b):
        g = g.reshape(1, -1, 1, 1)
        b = b.reshape(1, -1, 1, 1)
        mean = jnp.mean(x, axis=(2, 3), keepdims=True)
        var = jnp.mean((x - mean) ** 2, axis=(2, 3), keepdims=True)
        return (x - mean) / jnp.sqrt(var + EPS) * g + b

    y = _leaky(inorm(conv3x3(x_nchw, params["w1"]), params["g1"], params["b1"]))
    y = inorm(conv3x3(y, params["w2"]), params["g2"], params["b2"])
    r = jnp.einsum("nchw,cd->ndhw", x_nchw, params["wr"])
    r = inorm(r, params["gr"], params["br"])
    return _leaky(y + r)


def init_params(key, in_ch, out_ch):
    k1, k2, k3, k4, k5 = jax.random.split(key, 5)
    return {
        "w1": 0.1 * jax.random.normal(k1, (3, 3, in_ch, out_ch), jnp.float32),
        "g1": 1.0 + 0.1 * jax.random.normal(k4, (out_ch,), jnp.float32),
        "b1": 0.1 * jax.random.normal(k5, (out_ch,), jnp.float32),
        "w2": 0.1 * jax.random.normal(k2, (3, 3, out_ch, out_ch), jnp.float32),
        "g2": jnp.ones((out_ch,), jnp.float32),
        "b2": jnp.zeros((out_ch,), jnp.float32),
        "wr": 0.1 * jax.random.normal(k3, (in_ch, out_ch), jnp.float32),
        "gr": jnp.ones((out_ch,), jnp.float32),
        "br": jnp.zeros((out_ch,), jnp.float32),
    }


if __name__ == "__main__":
    key = jax.random.PRNGKey(0)
    kx, kp = jax.random.split(key)

    N, Cin, Cout, H, W = 2, 4, 8, 16, 16
    x = jax.random.normal(kx, (N, Cin, H, W), jnp.float32)
    params = init_params(kp, Cin, Cout)

    out = jax.block_until_ready(basic_conv_block(x, params))
    ref = jax.block_until_ready(reference_forward(x, params))

    np.testing.assert_allclose(np.asarray(out), np.asarray(ref), rtol=2e-3, atol=2e-3)
    print("KERNEL_OK")
</pallas_src>

<mosaic_0001>
module attributes {stable_mosaic.version = 11 : i64} {
  func.func @basic_conv_block_kernel(%arg0: i32, %arg1: memref<1x8x512xf32, #tpu.memory_space<vmem>>, %arg2: memref<16x72xf32, #tpu.memory_space<vmem>>, %arg3: memref<8x72xf32, #tpu.memory_space<vmem>>, %arg4: memref<16x4xf32, #tpu.memory_space<vmem>>, %arg5: memref<9x512xf32, #tpu.memory_space<vmem>>, %arg6: memref<1x8x512xf32, #tpu.memory_space<vmem>>) attributes {dimension_semantics = [#tpu.dimension_semantics<parallel>], iteration_bounds = array<i64: 1>, scalar_prefetch = 0 : i64, scratch_operands = 0 : i64, tpu.core_type = #tpu.core_type<tc>, window_params = [{transform_indices = @transform_0, window_bounds = array<i64: 1, 8, 512>}, {pipeline_mode = #tpu.pipeline_mode<synchronous>, transform_indices = @transform_1, window_bounds = array<i64: 16, 72>}, {pipeline_mode = #tpu.pipeline_mode<synchronous>, transform_indices = @transform_2, window_bounds = array<i64: 8, 72>}, {pipeline_mode = #tpu.pipeline_mode<synchronous>, transform_indices = @transform_3, window_bounds = array<i64: 16, 4>}, {pipeline_mode = #tpu.pipeline_mode<synchronous>, transform_indices = @transform_4, window_bounds = array<i64: 9, 512>}, {transform_indices = @transform_5, window_bounds = array<i64: 1, 8, 512>}]} {
    %c0 = arith.constant 0 : index
    %c0_0 = arith.constant 0 : index
    %0 = vector.load %arg5[%c0, %c0_0] : memref<9x512xf32, #tpu.memory_space<vmem>>, vector<9x512xf32>
    %c0_1 = arith.constant 0 : index
    %c0_2 = arith.constant 0 : index
    %c0_3 = arith.constant 0 : index
    %1 = vector.load %arg1[%c0_1, %c0_2, %c0_3] : memref<1x8x512xf32, #tpu.memory_space<vmem>>, vector<1x8x512xf32>
    %2 = vector.shape_cast %1 : vector<1x8x512xf32> to vector<8x512xf32>
    %c0_4 = arith.constant 0 : index
    %c0_5 = arith.constant 0 : index
    %3 = vector.load %arg2[%c0_4, %c0_5] : memref<16x72xf32, #tpu.memory_space<vmem>>, vector<16x72xf32>
    %c17_i32 = arith.constant 17 : i32
    %4 = tpu.dynamic_rotate %2 by %c17_i32 dim 1 : vector<8x512xf32>, i32 -> vector<8x512xf32>
    %5 = vector.extract_strided_slice %0 {offsets = [0, 0], sizes = [1, 512], strides = [1, 1]} : vector<9x512xf32> to vector<1x512xf32>
    %6 = vector.broadcast %5 : vector<1x512xf32> to vector<8x512xf32>
    %7 = arith.mulf %4, %6 : vector<8x512xf32>
    %c16_i32 = arith.constant 16 : i32
    %8 = tpu.dynamic_rotate %2 by %c16_i32 dim 1 : vector<8x512xf32>, i32 -> vector<8x512xf32>
    %9 = vector.extract_strided_slice %0 {offsets = [1, 0], sizes = [1, 512], strides = [1, 1]} : vector<9x512xf32> to vector<1x512xf32>
    %10 = vector.broadcast %9 : vector<1x512xf32> to vector<8x512xf32>
    %11 = arith.mulf %8, %10 : vector<8x512xf32>
    %c15_i32 = arith.constant 15 : i32
    %12 = tpu.dynamic_rotate %2 by %c15_i32 dim 1 : vector<8x512xf32>, i32 -> vector<8x512xf32>
    %13 = vector.extract_strided_slice %0 {offsets = [2, 0], sizes = [1, 512], strides = [1, 1]} : vector<9x512xf32> to vector<1x512xf32>
    %14 = vector.broadcast %13 : vector<1x512xf32> to vector<8x512xf32>
    %15 = arith.mulf %12, %14 : vector<8x512xf32>
    %c1_i32 = arith.constant 1 : i32
    %16 = tpu.dynamic_rotate %2 by %c1_i32 dim 1 : vector<8x512xf32>, i32 -> vector<8x512xf32>
    %17 = vector.extract_strided_slice %0 {offsets = [3, 0], sizes = [1, 512], strides = [1, 1]} : vector<9x512xf32> to vector<1x512xf32>
    %18 = vector.broadcast %17 : vector<1x512xf32> to vector<8x512xf32>
    %19 = arith.mulf %16, %18 : vector<8x512xf32>
    %c511_i32 = arith.constant 511 : i32
    %20 = tpu.dynamic_rotate %2 by %c511_i32 dim 1 : vector<8x512xf32>, i32 -> vector<8x512xf32>
    %21 = vector.extract_strided_slice %0 {offsets = [5, 0], sizes = [1, 512], strides = [1, 1]} : vector<9x512xf32> to vector<1x512xf32>
    %22 = vector.broadcast %21 : vector<1x512xf32> to vector<8x512xf32>
    %23 = arith.mulf %20, %22 : vector<8x512xf32>
    %c497_i32 = arith.constant 497 : i32
    %24 = tpu.dynamic_rotate %2 by %c497_i32 dim 1 : vector<8x512xf32>, i32 -> vector<8x512xf32>
    %25 = vector.extract_strided_slice %0 {offsets = [6, 0], sizes = [1, 512], strides = [1, 1]} : vector<9x512xf32> to vector<1x512xf32>
    %26 = vector.broadcast %25 : vector<1x512xf32> to vector<8x512xf32>
    %27 = arith.mulf %24, %26 : vector<8x512xf32>
    %c496_i32 = arith.constant 496 : i32
    %28 = tpu.dynamic_rotate %2 by %c496_i32 dim 1 : vector<8x512xf32>, i32 -> vector<8x512xf32>
    %29 = vector.extract_strided_slice %0 {offsets = [7, 0], sizes = [1, 512], strides = [1, 1]} : vector<9x512xf32> to vector<1x512xf32>
    %30 = vector.broadcast %29 : vector<1x512xf32> to vector<8x512xf32>
    %31 = arith.mulf %28, %30 : vector<8x512xf32>
    %c495_i32 = arith.constant 495 : i32
    %32 = tpu.dynamic_rotate %2 by %c495_i32 dim 1 : vector<8x512xf32>, i32 -> vector<8x512xf32>
    %33 = vector.extract_strided_slice %0 {offsets = [8, 0], sizes = [1, 512], strides = [1, 1]} : vector<9x512xf32> to vector<1x512xf32>
    %34 = vector.broadcast %33 : vector<1x512xf32> to vector<8x512xf32>
    %35 = arith.mulf %32, %34 : vector<8x512xf32>
    %36 = tpu.concatenate %7, %11, %15, %19, %2, %23, %27, %31, %35 in 0 : vector<8x512xf32>, vector<8x512xf32>, vector<8x512xf32>, vector<8x512xf32>, vector<8x512xf32>, vector<8x512xf32>, vector<8x512xf32>, vector<8x512xf32>, vector<8x512xf32> -> vector<72x512xf32>
    %cst = arith.constant dense<0.000000e+00> : vector<16x512xf32>
    %37 = tpu.matmul %3, %36, %cst {dimension_numbers = #tpu.dot_dimension_numbers<[1], [0], [0], [1], [0, 0, 1, 1], [], []>} : vector<16x72xf32>, vector<72x512xf32>, vector<16x512xf32> -> vector<16x512xf32>
    %c0_6 = arith.constant 0 : index
    %c0_7 = arith.constant 0 : index
    %38 = vector.load %arg4[%c0_6, %c0_7] : memref<16x4xf32, #tpu.memory_space<vmem>>, vector<16x1xf32>
    %c0_8 = arith.constant 0 : index
    %c1 = arith.constant 1 : index
    %39 = vector.load %arg4[%c0_8, %c1] : memref<16x4xf32, #tpu.memory_space<vmem>>, vector<16x1xf32>
    %40 = vector.extract_strided_slice %37 {offsets = [0, 0], sizes = [16, 256], strides = [1, 1]} : vector<16x512xf32> to vector<16x256xf32>
    %cst_9 = arith.constant dense<0.000000e+00> : vector<16xf32>
    %41 = vector.multi_reduction <add>, %40, %cst_9 [1] : vector<16x256xf32> to vector<16xf32>
    %42 = vector.shape_cast %41 : vector<16xf32> to vector<16x1xf32>
    %cst_10 = arith.constant 3.906250e-03 : f32
    %43 = vector.broadcast %cst_10 : f32 to vector<16x1xf32>
    %44 = arith.mulf %42, %43 : vector<16x1xf32>
    %45 = vector.broadcast %44 : vector<16x1xf32> to vector<16x256xf32>
    %46 = arith.subf %40, %45 : vector<16x256xf32>
    %47 = arith.mulf %46, %46 : vector<16x256xf32>
    %cst_11 = arith.constant dense<0.000000e+00> : vector<16xf32>
    %48 = vector.multi_reduction <add>, %47, %cst_11 [1] : vector<16x256xf32> to vector<16xf32>
    %49 = vector.shape_cast %48 : vector<16xf32> to vector<16x1xf32>
    %cst_12 = arith.constant 3.906250e-03 : f32
    %50 = vector.broadcast %cst_12 : f32 to vector<16x1xf32>
    %51 = arith.mulf %49, %50 : vector<16x1xf32>
    %cst_13 = arith.constant 9.99999974E-6 : f32
    %52 = vector.broadcast %cst_13 : f32 to vector<16x1xf32>
    %53 = arith.addf %51, %52 : vector<16x1xf32>
    %54 = math.rsqrt %53 : vector<16x1xf32>
    %55 = arith.mulf %38, %54 : vector<16x1xf32>
    %56 = vector.broadcast %55 : vector<16x1xf32> to vector<16x256xf32>
    %57 = arith.mulf %46, %56 : vector<16x256xf32>
    %58 = vector.broadcast %39 : vector<16x1xf32> to vector<16x256xf32>
    %59 = arith.addf %57, %58 : vector<16x256xf32>
    %60 = vector.extract_strided_slice %37 {offsets = [0, 256], sizes = [16, 256], strides = [1, 1]} : vector<16x512xf32> to vector<16x256xf32>
    %cst_14 = arith.constant dense<0.000000e+00> : vector<16xf32>
    %61 = vector.multi_reduction <add>, %60, %cst_14 [1] : vector<16x256xf32> to vector<16xf32>
    %62 = vector.shape_cast %61 : vector<16xf32> to vector<16x1xf32>
    %cst_15 = arith.constant 3.906250e-03 : f32
    %63 = vector.broadcast %cst_15 : f32 to vector<16x1xf32>
    %64 = arith.mulf %62, %63 : vector<16x1xf32>
    %65 = vector.broadcast %64 : vector<16x1xf32> to vector<16x256xf32>
    %66 = arith.subf %60, %65 : vector<16x256xf32>
    %67 = arith.mulf %66, %66 : vector<16x256xf32>
    %cst_16 = arith.constant dense<0.000000e+00> : vector<16xf32>
    %68 = vector.multi_reduction <add>, %67, %cst_16 [1] : vector<16x256xf32> to vector<16xf32>
    %69 = vector.shape_cast %68 : vector<16xf32> to vector<16x1xf32>
    %cst_17 = arith.constant 3.906250e-03 : f32
    %70 = vector.broadcast %cst_17 : f32 to vector<16x1xf32>
    %71 = arith.mulf %69, %70 : vector<16x1xf32>
    %cst_18 = arith.constant 9.99999974E-6 : f32
    %72 = vector.broadcast %cst_18 : f32 to vector<16x1xf32>
    %73 = arith.addf %71, %72 : vector<16x1xf32>
    %74 = math.rsqrt %73 : vector<16x1xf32>
    %75 = arith.mulf %38, %74 : vector<16x1xf32>
    %76 = vector.broadcast %75 : vector<16x1xf32> to vector<16x256xf32>
    %77 = arith.mulf %66, %76 : vector<16x256xf32>
    %78 = vector.broadcast %39 : vector<16x1xf32> to vector<16x256xf32>
    %79 = arith.addf %77, %78 : vector<16x256xf32>
    %80 = tpu.concatenate %59, %79 in 1 : vector<16x256xf32>, vector<16x256xf32> -> vector<16x512xf32>
    %81 = vector.extract_strided_slice %80 {offsets = [0, 0], sizes = [8, 512], strides = [1, 1]} : vector<16x512xf32> to vector<8x512xf32>
    %cst_19 = arith.constant 0.000000e+00 : f32
    %82 = vector.broadcast %cst_19 : f32 to vector<8x512xf32>
    %83 = arith.cmpf oge, %81, %82 : vector<8x512xf32>
    %cst_20 = arith.constant 0.00999999977 : f32
    %84 = vector.broadcast %cst_20 : f32 to vector<8x512xf32>
    %85 = arith.mulf %84, %81 : vector<8x512xf32>
    %86 = arith.select %83, %81, %85 : vector<8x512xi1>, vector<8x512xf32>
    %87 = vector.extract_strided_slice %80 {offsets = [8, 0], sizes = [8, 512], strides = [1, 1]} : vector<16x512xf32> to vector<8x512xf32>
    %c0_21 = arith.constant 0 : index
    %c0_22 = arith.constant 0 : index
    %88 = vector.load %arg3[%c0_21, %c0_22] : memref<8x72xf32, #tpu.memory_space<vmem>>, vector<8x72xf32>
    %c17_i32_23 = arith.constant 17 : i32
    %89 = tpu.dynamic_rotate %86 by %c17_i32_23 dim 1 : vector<8x512xf32>, i32 -> vector<8x512xf32>
    %90 = vector.extract_strided_slice %0 {offsets = [0, 0], sizes = [1, 512], strides = [1, 1]} : vector<9x512xf32> to vector<1x512xf32>
    %91 = vector.broadcast %90 : vector<1x512xf32> to vector<8x512xf32>
    %92 = arith.mulf %89, %91 : vector<8x512xf32>
    %c16_i32_24 = arith.constant 16 : i32
    %93 = tpu.dynamic_rotate %86 by %c16_i32_24 dim 1 : vector<8x512xf32>, i32 -> vector<8x512xf32>
    %94 = vector.extract_strided_slice %0 {offsets = [1, 0], sizes = [1, 512], strides = [1, 1]} : vector<9x512xf32> to vector<1x512xf32>
    %95 = vector.broadcast %94 : vector<1x512xf32> to vector<8x512xf32>
    %96 = arith.mulf %93, %95 : vector<8x512xf32>
    %c15_i32_25 = arith.constant 15 : i32
    %97 = tpu.dynamic_rotate %86 by %c15_i32_25 dim 1 : vector<8x512xf32>, i32 -> vector<8x512xf32>
    %98 = vector.extract_strided_slice %0 {offsets = [2, 0], sizes = [1, 512], strides = [1, 1]} : vector<9x512xf32> to vector<1x512xf32>
    %99 = vector.broadcast %98 : vector<1x512xf32> to vector<8x512xf32>
    %100 = arith.mulf %97, %99 : vector<8x512xf32>
    %c1_i32_26 = arith.constant 1 : i32
    %101 = tpu.dynamic_rotate %86 by %c1_i32_26 dim 1 : vector<8x512xf32>, i32 -> vector<8x512xf32>
    %102 = vector.extract_strided_slice %0 {offsets = [3, 0], sizes = [1, 512], strides = [1, 1]} : vector<9x512xf32> to vector<1x512xf32>
    %103 = vector.broadcast %102 : vector<1x512xf32> to vector<8x512xf32>
    %104 = arith.mulf %101, %103 : vector<8x512xf32>
    %c511_i32_27 = arith.constant 511 : i32
    %105 = tpu.dynamic_rotate %86 by %c511_i32_27 dim 1 : vector<8x512xf32>, i32 -> vector<8x512xf32>
    %106 = vector.extract_strided_slice %0 {offsets = [5, 0], sizes = [1, 512], strides = [1, 1]} : vector<9x512xf32> to vector<1x512xf32>
    %107 = vector.broadcast %106 : vector<1x512xf32> to vector<8x512xf32>
    %108 = arith.mulf %105, %107 : vector<8x512xf32>
    %c497_i32_28 = arith.constant 497 : i32
    %109 = tpu.dynamic_rotate %86 by %c497_i32_28 dim 1 : vector<8x512xf32>, i32 -> vector<8x512xf32>
    %110 = vector.extract_strided_slice %0 {offsets = [6, 0], sizes = [1, 512], strides = [1, 1]} : vector<9x512xf32> to vector<1x512xf32>
    %111 = vector.broadcast %110 : vector<1x512xf32> to vector<8x512xf32>
    %112 = arith.mulf %109, %111 : vector<8x512xf32>
    %c496_i32_29 = arith.constant 496 : i32
    %113 = tpu.dynamic_rotate %86 by %c496_i32_29 dim 1 : vector<8x512xf32>, i32 -> vector<8x512xf32>
    %114 = vector.extract_strided_slice %0 {offsets = [7, 0], sizes = [1, 512], strides = [1, 1]} : vector<9x512xf32> to vector<1x512xf32>
    %115 = vector.broadcast %114 : vector<1x512xf32> to vector<8x512xf32>
    %116 = arith.mulf %113, %115 : vector<8x512xf32>
    %c495_i32_30 = arith.constant 495 : i32
    %117 = tpu.dynamic_rotate %86 by %c495_i32_30 dim 1 : vector<8x512xf32>, i32 -> vector<8x512xf32>
    %118 = vector.extract_strided_slice %0 {offsets = [8, 0], sizes = [1, 512], strides = [1, 1]} : vector<9x512xf32> to vector<1x512xf32>
    %119 = vector.broadcast %118 : vector<1x512xf32> to vector<8x512xf32>
    %120 = arith.mulf %117, %119 : vector<8x512xf32>
    %121 = tpu.concatenate %92, %96, %100, %104, %86, %108, %112, %116, %120 in 0 : vector<8x512xf32>, vector<8x512xf32>, vector<8x512xf32>, vector<8x512xf32>, vector<8x512xf32>, vector<8x512xf32>, vector<8x512xf32>, vector<8x512xf32>, vector<8x512xf32> -> vector<72x512xf32>
    %cst_31 = arith.constant dense<0.000000e+00> : vector<8x512xf32>
    %122 = tpu.matmul %88, %121, %cst_31 {dimension_numbers = #tpu.dot_dimension_numbers<[1], [0], [0], [1], [0, 0, 1, 1], [], []>} : vector<8x72xf32>, vector<72x512xf32>, vector<8x512xf32> -> vector<8x512xf32>
    %c0_32 = arith.constant 0 : index
    %c2 = arith.constant 2 : index
    %123 = vector.load %arg4[%c0_32, %c2] : memref<16x4xf32, #tpu.memory_space<vmem>>, vector<8x1xf32>
    %c0_33 = arith.constant 0 : index
    %c3 = arith.constant 3 : index
    %124 = vector.load %arg4[%c0_33, %c3] : memref<16x4xf32, #tpu.memory_space<vmem>>, vector<8x1xf32>
    %125 = vector.extract_strided_slice %122 {offsets = [0, 0], sizes = [8, 256], strides = [1, 1]} : vector<8x512xf32> to vector<8x256xf32>
    %cst_34 = arith.constant dense<0.000000e+00> : vector<8xf32>
    %126 = vector.multi_reduction <add>, %125, %cst_34 [1] : vector<8x256xf32> to vector<8xf32>
    %127 = vector.shape_cast %126 : vector<8xf32> to vector<8x1xf32>
    %cst_35 = arith.constant 3.906250e-03 : f32
    %128 = vector.broadcast %cst_35 : f32 to vector<8x1xf32>
    %129 = arith.mulf %127, %128 : vector<8x1xf32>
    %130 = vector.broadcast %129 : vector<8x1xf32> to vector<8x256xf32>
    %131 = arith.subf %125, %130 : vector<8x256xf32>
    %132 = arith.mulf %131, %131 : vector<8x256xf32>
    %cst_36 = arith.constant dense<0.000000e+00> : vector<8xf32>
    %133 = vector.multi_reduction <add>, %132, %cst_36 [1] : vector<8x256xf32> to vector<8xf32>
    %134 = vector.shape_cast %133 : vector<8xf32> to vector<8x1xf32>
    %cst_37 = arith.constant 3.906250e-03 : f32
    %135 = vector.broadcast %cst_37 : f32 to vector<8x1xf32>
    %136 = arith.mulf %134, %135 : vector<8x1xf32>
    %cst_38 = arith.constant 9.99999974E-6 : f32
    %137 = vector.broadcast %cst_38 : f32 to vector<8x1xf32>
    %138 = arith.addf %136, %137 : vector<8x1xf32>
    %139 = math.rsqrt %138 : vector<8x1xf32>
    %140 = arith.mulf %123, %139 : vector<8x1xf32>
    %141 = vector.broadcast %140 : vector<8x1xf32> to vector<8x256xf32>
    %142 = arith.mulf %131, %141 : vector<8x256xf32>
    %143 = vector.broadcast %124 : vector<8x1xf32> to vector<8x256xf32>
    %144 = arith.addf %142, %143 : vector<8x256xf32>
    %145 = vector.extract_strided_slice %122 {offsets = [0, 256], sizes = [8, 256], strides = [1, 1]} : vector<8x512xf32> to vector<8x256xf32>
    %cst_39 = arith.constant dense<0.000000e+00> : vector<8xf32>
    %146 = vector.multi_reduction <add>, %145, %cst_39 [1] : vector<8x256xf32> to vector<8xf32>
    %147 = vector.shape_cast %146 : vector<8xf32> to vector<8x1xf32>
    %cst_40 = arith.constant 3.906250e-03 : f32
    %148 = vector.broadcast %cst_40 : f32 to vector<8x1xf32>
    %149 = arith.mulf %147, %148 : vector<8x1xf32>
    %150 = vector.broadcast %149 : vector<8x1xf32> to vector<8x256xf32>
    %151 = arith.subf %145, %150 : vector<8x256xf32>
    %152 = arith.mulf %151, %151 : vector<8x256xf32>
    %cst_41 = arith.constant dense<0.000000e+00> : vector<8xf32>
    %153 = vector.multi_reduction <add>, %152, %cst_41 [1] : vector<8x256xf32> to vector<8xf32>
    %154 = vector.shape_cast %153 : vector<8xf32> to vector<8x1xf32>
    %cst_42 = arith.constant 3.906250e-03 : f32
    %155 = vector.broadcast %cst_42 : f32 to vector<8x1xf32>
    %156 = arith.mulf %154, %155 : vector<8x1xf32>
    %cst_43 = arith.constant 9.99999974E-6 : f32
    %157 = vector.broadcast %cst_43 : f32 to vector<8x1xf32>
    %158 = arith.addf %156, %157 : vector<8x1xf32>
    %159 = math.rsqrt %158 : vector<8x1xf32>
    %160 = arith.mulf %123, %159 : vector<8x1xf32>
    %161 = vector.broadcast %160 : vector<8x1xf32> to vector<8x256xf32>
    %162 = arith.mulf %151, %161 : vector<8x256xf32>
    %163 = vector.broadcast %124 : vector<8x1xf32> to vector<8x256xf32>
    %164 = arith.addf %162, %163 : vector<8x256xf32>
    %165 = tpu.concatenate %144, %164 in 1 : vector<8x256xf32>, vector<8x256xf32> -> vector<8x512xf32>
    %166 = arith.addf %165, %87 : vector<8x512xf32>
    %cst_44 = arith.constant 0.000000e+00 : f32
    %167 = vector.broadcast %cst_44 : f32 to vector<8x512xf32>
    %168 = arith.cmpf oge, %166, %167 : vector<8x512xf32>
    %cst_45 = arith.constant 0.00999999977 : f32
    %169 = vector.broadcast %cst_45 : f32 to vector<8x512xf32>
    %170 = arith.mulf %169, %166 : vector<8x512xf32>
    %171 = arith.select %168, %166, %170 : vector<8x512xi1>, vector<8x512xf32>
    %c0_46 = arith.constant 0 : index
    %c0_47 = arith.constant 0 : index
    %c0_48 = arith.constant 0 : index
    %172 = vector.load %arg6[%c0_46, %c0_47, %c0_48] : memref<1x8x512xf32, #tpu.memory_space<vmem>>, vector<1x8x512xf32>
    %173 = vector.shape_cast %172 : vector<1x8x512xf32> to vector<8x512xf32>
    %174 = vector.shape_cast %171 : vector<8x512xf32> to vector<1x8x512xf32>
    tpu.vector_store %arg6[%c0_46, %c0_47, %c0_48], %174 {strides = array<i32>} : memref<1x8x512xf32, #tpu.memory_space<vmem>>, vector<1x8x512xf32>,
    return
  }
  func.func @transform_0(%arg0: i32) -> (i32, i32, i32) {
    %c0_i32 = arith.constant 0 : i32
    %c0_i32_0 = arith.constant 0 : i32
    %c0_i32_1 = arith.constant 0 : i32
    return %arg0, %c0_i32, %c0_i32_0 : i32, i32, i32
  }
  func.func @transform_1(%arg0: i32) -> (i32, i32) {
    %c0_i32 = arith.constant 0 : i32
    %c0_i32_0 = arith.constant 0 : i32
    %c0_i32_1 = arith.constant 0 : i32
    return %c0_i32, %c0_i32_0 : i32, i32
  }
  func.func @transform_2(%arg0: i32) -> (i32, i32) {
    %c0_i32 = arith.constant 0 : i32
    %c0_i32_0 = arith.constant 0 : i32
    %c0_i32_1 = arith.constant 0 : i32
    return %c0_i32, %c0_i32_0 : i32, i32
  }
  func.func @transform_3(%arg0: i32) -> (i32, i32) {
    %c0_i32 = arith.constant 0 : i32
    %c0_i32_0 = arith.constant 0 : i32
    %c0_i32_1 = arith.constant 0 : i32
    return %c0_i32, %c0_i32_0 : i32, i32
  }
  func.func @transform_4(%arg0: i32) -> (i32, i32) {
    %c0_i32 = arith.constant 0 : i32
    %c0_i32_0 = arith.constant 0 : i32
    %c0_i32_1 = arith.constant 0 : i32
    return %c0_i32, %c0_i32_0 : i32, i32
  }
  func.func @transform_5(%arg0: i32) -> (i32, i32, i32) {
    %c0_i32 = arith.constant 0 : i32
    %c0_i32_0 = arith.constant 0 : i32
    %c0_i32_1 = arith.constant 0 : i32
    return %arg0, %c0_i32, %c0_i32_0 : i32, i32, i32
  }
}

</mosaic_0001>

<llo_original>
// kernel: tpu_custom_call.1
$region0: #{tpu_custom_call.1}
  #allocation0 [shape = 'u32[]', space=smem, size = 0x4, offset = 0x4, fixed_abs, tag = 'smem constant byte address 0x4 - core index']
  #allocation1 [shape = 'u32[144,128]{1,0:T(1,128)}', space=vmem, size = 0x12000, scoped, tag = 'internal scratch']
  %s0 = inlined_call_operand.hbm [shape: f32[1,8,512], index: 0, kind: input, shape index: {}]
  %s1 = inlined_call_operand.vmem [shape: f32[16,72], index: 1, kind: input, shape index: {}]
  %s2 = inlined_call_operand.hbm [shape: f32[8,72], index: 2, kind: input, shape index: {}]
  %s3 = inlined_call_operand.vmem [shape: f32[16,4], index: 3, kind: input, shape index: {}]
  %s4 = inlined_call_operand.hbm [shape: f32[9,512], index: 4, kind: input, shape index: {}]
  %s5 = inlined_call_operand.hbm [shape: f32[1,8,512], index: 5, kind: output, shape index: {}]
  %s6 = sld [smem:[#allocation0]]
  $region42: #{tpu_custom_call.1} parent=0
    _
  %s8 = ssub.s32 1, %s6
  %s9 = scalar_select 0, %s8, %s6
  $region1: #{tpu_custom_call.1} parent=0
    #allocation2 [shape = 'u8[16384]{0}', space=vmem, size = 0x4000, scoped, tag = 'input window, operand 0, single buffered']
    #allocation3 [shape = 's32[1]{0}', space=sflag, size = 0x4, scoped, tag = 'scoped memory for tpu_custom_call.1']
    #allocation4 [shape = 's32[1]{0}', space=sflag, size = 0x4, scoped, tag = 'scoped memory for tpu_custom_call.1']
    #allocation5 [shape = 'u8[4096]{0}', space=vmem, size = 0x1000, scoped, tag = 'input window, operand 2, single buffered']
    #allocation6 [shape = 's32[1]{0}', space=sflag, size = 0x4, scoped, tag = 'scoped memory for tpu_custom_call.1']
    #allocation7 [shape = 'u8[32768]{0}', space=vmem, size = 0x8000, scoped, tag = 'input window, operand 4, single buffered']
    #allocation8 [shape = 'u8[16384]{0}', space=vmem, size = 0x4000, scoped, tag = 'output window, operand 0, single buffered']
    %10 = vsyncpa [#allocation3], 0
    %11 = vsyncpa [#allocation6], 0
    %12 = vsyncpa [#allocation4], 0
    // Predicated region
    $region2: #{tpu_custom_call.1} parent=1 // pred_check
      _
    $region3: #{tpu_custom_call.1} parent=1 // pred_check_branch
      %14 = sbr.rel (0) target = $region5
    $region4: #{tpu_custom_call.1} parent=1 // pred_region
      %s16 = ssub.s32 512, 512
      %17 = vsyncadd [#allocation3], %s16
      %s19 = sshll.u32 [#allocation2], 4
      %s20 = int_to_ptr.vmem [resolvable:$true] %s19
      %22 = dma.hbm_to_vmem [thread:$0]  %s0, 512, %s20, [#allocation3]
    $region5: #{tpu_custom_call.1} parent=1 // pred_fallthru
      _
    // Predicated region
    $region6: #{tpu_custom_call.1} parent=1 // pred_check
      _
    $region7: #{tpu_custom_call.1} parent=1 // pred_check_branch
      %24 = sbr.rel (0) target = $region9
    $region8: #{tpu_custom_call.1} parent=1 // pred_region
      _
    $region9: #{tpu_custom_call.1} parent=1 // pred_fallthru
      _
    // Predicated region
    $region10: #{tpu_custom_call.1} parent=1 // pred_check
      _
    $region11: #{tpu_custom_call.1} parent=1 // pred_check_branch
      %26 = sbr.rel (0) target = $region13
    $region12: #{tpu_custom_call.1} parent=1 // pred_region
      %s28 = ssub.s32 128, 128
      %29 = vsyncadd [#allocation6], %s28
      %s31 = sshll.u32 [#allocation5], 4
      %s32 = int_to_ptr.vmem [resolvable:$true] %s31
      %34 = dma.hbm_to_vmem [thread:$0]  %s2, 128, %s32, [#allocation6]
    $region13: #{tpu_custom_call.1} parent=1 // pred_fallthru
      _
    // Predicated region
    $region14: #{tpu_custom_call.1} parent=1 // pred_check
      _
    $region15: #{tpu_custom_call.1} parent=1 // pred_check_branch
      %36 = sbr.rel (0) target = $region17
    $region16: #{tpu_custom_call.1} parent=1 // pred_region
      _
    $region17: #{tpu_custom_call.1} parent=1 // pred_fallthru
      _
    // Predicated region
    $region18: #{tpu_custom_call.1} parent=1 // pred_check
      _
    $region19: #{tpu_custom_call.1} parent=1 // pred_check_branch
      %38 = sbr.rel (0) target = $region21
    $region20: #{tpu_custom_call.1} parent=1 // pred_region
      %s40 = ssub.s32 1024, 1024
      %41 = vsyncadd [#allocation6], %s40
      %s42 = sshll.u32 [#allocation7], 4
      %s43 = int_to_ptr.vmem [resolvable:$true] %s42
      %48 = dma.hbm_to_vmem [thread:$0]  %s4, 1024, %s43, [#allocation6], 512, 512, 32
    $region21: #{tpu_custom_call.1} parent=1 // pred_fallthru
      _
    // Predicated region
    $region22: #{tpu_custom_call.1} parent=1 // pred_check
      _
    $region23: #{tpu_custom_call.1} parent=1 // pred_check_branch
      %50 = sbr.rel (0) target = $region25
    $region24: #{tpu_custom_call.1} parent=1 // pred_region
      %51 = dma.done [#allocation3], 512
    $region25: #{tpu_custom_call.1} parent=1 // pred_fallthru
      _
    // Predicated region
    $region26: #{tpu_custom_call.1} parent=1 // pred_check
      _
    $region27: #{tpu_custom_call.1} parent=1 // pred_check_branch
      %53 = sbr.rel (0) target = $region29
    $region28: #{tpu_custom_call.1} parent=1 // pred_region
      %54 = dma.done [#allocation6], 128
    $region29: #{tpu_custom_call.1} parent=1 // pred_fallthru
      _
    // Predicated region
    $region30: #{tpu_custom_call.1} parent=1 // pred_check
      _
    $region31: #{tpu_custom_call.1} parent=1 // pred_check_branch
      %56 = sbr.rel (0) target = $region33
    $region32: #{tpu_custom_call.1} parent=1 // pred_region
      %57 = dma.done [#allocation6], 1024
    $region33: #{tpu_custom_call.1} parent=1 // pred_fallthru
      _
    %v58 = vld [vmem:[#allocation7] sm:$0xff]
    %v59 = vld [vmem:[#allocation7 + $0x8] sm:$0xff]
    %v60 = vld [vmem:[#allocation7 + $0x10] sm:$0xff]
    %v61 = vld [vmem:[#allocation7 + $0x18] sm:$0xff]
    %v62 = vld [vmem:[#allocation7 + $0x20] sm:$0x1]
    %v63 = vld [vmem:[#allocation7 + $0x28] sm:$0x1]
    %v64 = vld [vmem:[#allocation7 + $0x30] sm:$0x1]
    %v65 = vld [vmem:[#allocation7 + $0x38] sm:$0x1]
    %v66 = vld [vmem:[#allocation2] sm:$0xff]
    %v67 = vld [vmem:[#allocation2 + $0x8] sm:$0xff]
    %v68 = vld [vmem:[#allocation2 + $0x10] sm:$0xff]
    %v69 = vld [vmem:[#allocation2 + $0x18] sm:$0xff]
    %v70 = vld [vmem:[%s1] sm:$0xff]
    %v71 = vld [vmem:[%s1 + $0x8] sm:$0xff]
    %72 = vrot.lane.b32.xlu0 %v66, 17
    %v73 = vpop.permute.xlu0 %72
    %74 = vrot.lane.b32.xlu0 %v67, 17
    %v75 = vpop.permute.xlu0 %74
    %76 = vrot.lane.b32.xlu0 %v68, 17
    %v77 = vpop.permute.xlu0 %76
    %78 = vrot.lane.b32.xlu0 %v69, 17
    %v79 = vpop.permute.xlu0 %78
    %v80 = vlaneseq
    %v81 = vand.u32 %v80, 127
    %vm82 = vcmp.lt.s32.totalorder %v81, 17
    %v83 = vsel %vm82, %v77, %v79
    %v84 = vsel %vm82, %v75, %v77
    %v85 = vsel %vm82, %v73, %v75
    %v86 = vsel %vm82, %v79, %v73
    %v87 = vlaneseq
    %v88 = vshrl.u32 %v87, 7
    %v89 = vsub.s32 0, %v88
    %v90 = vrot.slane %v58, %v89
    %v91 = vlaneseq
    %v92 = vshrl.u32 %v91, 7
    %v93 = vsub.s32 0, %v92
    %v94 = vrot.slane %v59, %v93
    %v95 = vlaneseq
    %v96 = vshrl.u32 %v95, 7
    %v97 = vsub.s32 0, %v96
    %v98 = vrot.slane %v60, %v97
    %v99 = vlaneseq
    %v100 = vshrl.u32 %v99, 7
    %v101 = vsub.s32 0, %v100
    %v102 = vrot.slane %v61, %v101
    %v103 = vmul.f32 %v86, %v90
    %v104 = vmul.f32 %v85, %v94
    %v105 = vmul.f32 %v84, %v98
    %v106 = vmul.f32 %v83, %v102
    %107 = vrot.lane.b32.xlu0 %v66, 16
    %v108 = vpop.permute.xlu0 %107
    %109 = vrot.lane.b32.xlu0 %v67, 16
    %v110 = vpop.permute.xlu0 %109
    %111 = vrot.lane.b32.xlu0 %v68, 16
    %v112 = vpop.permute.xlu0 %111
    %113 = vrot.lane.b32.xlu0 %v69, 16
    %v114 = vpop.permute.xlu0 %113
    %vm115 = vcmp.lt.s32.totalorder %v81, 16
    %v116 = vsel %vm115, %v112, %v114
    %v117 = vsel %vm115, %v110, %v112
    %v118 = vsel %vm115, %v108, %v110
    %v119 = vsel %vm115, %v114, %v108
    %v120 = vlaneseq
    %v121 = vshrl.u32 %v120, 7
    %v122 = vsub.s32 1, %v121
    %v123 = vrot.slane %v58, %v122
    %v124 = vlaneseq
    %v125 = vshrl.u32 %v124, 7
    %v126 = vsub.s32 1, %v125
    %v127 = vrot.slane %v59, %v126
    %v128 = vlaneseq
    %v129 = vshrl.u32 %v128, 7
    %v130 = vsub.s32 1, %v129
    %v131 = vrot.slane %v60, %v130
    %v132 = vlaneseq
    %v133 = vshrl.u32 %v132, 7
    %v134 = vsub.s32 1, %v133
    %v135 = vrot.slane %v61, %v134
    %v136 = vmul.f32 %v119, %v123
    %v137 = vmul.f32 %v118, %v127
    %v138 = vmul.f32 %v117, %v131
    %v139 = vmul.f32 %v116, %v135
    %140 = vrot.lane.b32.xlu0 %v66, 15
    %v141 = vpop.permute.xlu0 %140
    %142 = vrot.lane.b32.xlu0 %v67, 15
    %v143 = vpop.permute.xlu0 %142
    %144 = vrot.lane.b32.xlu0 %v68, 15
    %v145 = vpop.permute.xlu0 %144
    %146 = vrot.lane.b32.xlu0 %v69, 15
    %v147 = vpop.permute.xlu0 %146
    %vm148 = vcmp.lt.s32.totalorder %v81, 15
    %v149 = vsel %vm148, %v145, %v147
    %v150 = vsel %vm148, %v143, %v145
    %v151 = vsel %vm148, %v141, %v143
    %v152 = vsel %vm148, %v147, %v141
    %v153 = vlaneseq
    %v154 = vshrl.u32 %v153, 7
    %v155 = vsub.s32 2, %v154
    %v156 = vrot.slane %v58, %v155
    %v157 = vlaneseq
    %v158 = vshrl.u32 %v157, 7
    %v159 = vsub.s32 2, %v158
    %v160 = vrot.slane %v59, %v159
    %v161 = vlaneseq
    %v162 = vshrl.u32 %v161, 7
    %v163 = vsub.s32 2, %v162
    %v164 = vrot.slane %v60, %v163
    %v165 = vlaneseq
    %v166 = vshrl.u32 %v165, 7
    %v167 = vsub.s32 2, %v166
    %v168 = vrot.slane %v61, %v167
    %v169 = vmul.f32 %v152, %v156
    %v170 = vmul.f32 %v151, %v160
    %v171 = vmul.f32 %v150, %v164
    %v172 = vmul.f32 %v149, %v168
    %173 = vrot.lane.b32.xlu0 %v66, 1
    %v174 = vpop.permute.xlu0 %173
    %175 = vrot.lane.b32.xlu0 %v67, 1
    %v176 = vpop.permute.xlu0 %175
    %177 = vrot.lane.b32.xlu0 %v68, 1
    %v178 = vpop.permute.xlu0 %177
    %179 = vrot.lane.b32.xlu0 %v69, 1
    %v180 = vpop.permute.xlu0 %179
    %vm181 = vcmp.lt.s32.totalorder %v81, 1
    %v182 = vsel %vm181, %v178, %v180
    %v183 = vsel %vm181, %v176, %v178
    %v184 = vsel %vm181, %v174, %v176
    %v185 = vsel %vm181, %v180, %v174
    %v186 = vlaneseq
    %v187 = vshrl.u32 %v186, 7
    %v188 = vsub.s32 3, %v187
    %v189 = vrot.slane %v58, %v188
    %v190 = vlaneseq
    %v191 = vshrl.u32 %v190, 7
    %v192 = vsub.s32 3, %v191
    %v193 = vrot.slane %v59, %v192
    %v194 = vlaneseq
    %v195 = vshrl.u32 %v194, 7
    %v196 = vsub.s32 3, %v195
    %v197 = vrot.slane %v60, %v196
    %v198 = vlaneseq
    %v199 = vshrl.u32 %v198, 7
    %v200 = vsub.s32 3, %v199
    %v201 = vrot.slane %v61, %v200
    %v202 = vmul.f32 %v185, %v189
    %v203 = vmul.f32 %v184, %v193
    %v204 = vmul.f32 %v183, %v197
    %v205 = vmul.f32 %v182, %v201
    %206 = vrot.lane.b32.xlu0 %v66, 127
    %v207 = vpop.permute.xlu0 %206
    %208 = vrot.lane.b32.xlu0 %v67, 127
    %v209 = vpop.permute.xlu0 %208
    %210 = vrot.lane.b32.xlu0 %v68, 127
    %v211 = vpop.permute.xlu0 %210
    %212 = vrot.lane.b32.xlu0 %v69, 127
    %v213 = vpop.permute.xlu0 %212
    %vm214 = vcmp.lt.s32.totalorder %v81, 127
    %v215 = vsel %vm214, %v211, %v213
    %v216 = vsel %vm214, %v209, %v211
    %v217 = vsel %vm214, %v207, %v209
    %v218 = vsel %vm214, %v213, %v207
    %v219 = vlaneseq
    %v220 = vshrl.u32 %v219, 7
    %v221 = vsub.s32 5, %v220
    %v222 = vrot.slane %v58, %v221
    %v223 = vlaneseq
    %v224 = vshrl.u32 %v223, 7
    %v225 = vsub.s32 5, %v224
    %v226 = vrot.slane %v59, %v225
    %v227 = vlaneseq
    %v228 = vshrl.u32 %v227, 7
    %v229 = vsub.s32 5, %v228
    %v230 = vrot.slane %v60, %v229
    %v231 = vlaneseq
    %v232 = vshrl.u32 %v231, 7
    %v233 = vsub.s32 5, %v232
    %v234 = vrot.slane %v61, %v233
    %v235 = vmul.f32 %v217, %v222
    %v236 = vmul.f32 %v216, %v226
    %v237 = vmul.f32 %v215, %v230
    %v238 = vmul.f32 %v218, %v234
    %239 = vrot.lane.b32.xlu0 %v66, 113
    %v240 = vpop.permute.xlu0 %239
    %241 = vrot.lane.b32.xlu0 %v67, 113
    %v242 = vpop.permute.xlu0 %241
    %243 = vrot.lane.b32.xlu0 %v68, 113
    %v244 = vpop.permute.xlu0 %243
    %245 = vrot.lane.b32.xlu0 %v69, 113
    %v246 = vpop.permute.xlu0 %245
    %vm247 = vcmp.lt.s32.totalorder %v81, 113
    %v248 = vsel %vm247, %v244, %v246
    %v249 = vsel %vm247, %v242, %v244
    %v250 = vsel %vm247, %v240, %v242
    %v251 = vsel %vm247, %v246, %v240
    %v252 = vlaneseq
    %v253 = vshrl.u32 %v252, 7
    %v254 = vsub.s32 6, %v253
    %v255 = vrot.slane %v58, %v254
    %v256 = vlaneseq
    %v257 = vshrl.u32 %v256, 7
    %v258 = vsub.s32 6, %v257
    %v259 = vrot.slane %v59, %v258
    %v260 = vlaneseq
    %v261 = vshrl.u32 %v260, 7
    %v262 = vsub.s32 6, %v261
    %v263 = vrot.slane %v60, %v262
    %v264 = vlaneseq
    %v265 = vshrl.u32 %v264, 7
    %v266 = vsub.s32 6, %v265
    %v267 = vrot.slane %v61, %v266
    %v268 = vmul.f32 %v250, %v255
    %v269 = vmul.f32 %v249, %v259
    %v270 = vmul.f32 %v248, %v263
    %v271 = vmul.f32 %v251, %v267
    %272 = vrot.lane.b32.xlu0 %v66, 112
    %v273 = vpop.permute.xlu0 %272
    %274 = vrot.lane.b32.xlu0 %v67, 112
    %v275 = vpop.permute.xlu0 %274
    %276 = vrot.lane.b32.xlu0 %v68, 112
    %v277 = vpop.permute.xlu0 %276
    %278 = vrot.lane.b32.xlu0 %v69, 112
    %v279 = vpop.permute.xlu0 %278
    %vm280 = vcmp.lt.s32.totalorder %v81, 112
    %v281 = vsel %vm280, %v277, %v279
    %v282 = vsel %vm280, %v275, %v277
    %v283 = vsel %vm280, %v273, %v275
    %v284 = vsel %vm280, %v279, %v273
    %v285 = vlaneseq
    %v286 = vshrl.u32 %v285, 7
    %v287 = vsub.s32 7, %v286
    %v288 = vrot.slane %v58, %v287
    %v289 = vlaneseq
    %v290 = vshrl.u32 %v289, 7
    %v291 = vsub.s32 7, %v290
    %v292 = vrot.slane %v59, %v291
    %v293 = vlaneseq
    %v294 = vshrl.u32 %v293, 7
    %v295 = vsub.s32 7, %v294
    %v296 = vrot.slane %v60, %v295
    %v297 = vlaneseq
    %v298 = vshrl.u32 %v297, 7
    %v299 = vsub.s32 7, %v298
    %v300 = vrot.slane %v61, %v299
    %v301 = vmul.f32 %v283, %v288
    %v302 = vmul.f32 %v282, %v292
    %v303 = vmul.f32 %v281, %v296
    %v304 = vmul.f32 %v284, %v300
    %305 = vrot.lane.b32.xlu0 %v66, 111
    %v306 = vpop.permute.xlu0 %305
    %307 = vrot.lane.b32.xlu0 %v67, 111
    %v308 = vpop.permute.xlu0 %307
    %309 = vrot.lane.b32.xlu0 %v68, 111
    %v310 = vpop.permute.xlu0 %309
    %311 = vrot.lane.b32.xlu0 %v69, 111
    %v312 = vpop.permute.xlu0 %311
    %vm313 = vcmp.lt.s32.totalorder %v81, 111
    %v314 = vsel %vm313, %v310, %v312
    %v315 = vsel %vm313, %v308, %v310
    %v316 = vsel %vm313, %v306, %v308
    %v317 = vsel %vm313, %v312, %v306
    %v318 = vlaneseq
    %v319 = vshrl.u32 %v318, 7
    %v320 = vsub.s32 0, %v319
    %v321 = vrot.slane %v62, %v320
    %v322 = vlaneseq
    %v323 = vshrl.u32 %v322, 7
    %v324 = vsub.s32 0, %v323
    %v325 = vrot.slane %v63, %v324
    %v326 = vlaneseq
    %v327 = vshrl.u32 %v326, 7
    %v328 = vsub.s32 0, %v327
    %v329 = vrot.slane %v64, %v328
    %v330 = vlaneseq
    %v331 = vshrl.u32 %v330, 7
    %v332 = vsub.s32 0, %v331
    %v333 = vrot.slane %v65, %v332
    %v334 = vmul.f32 %v316, %v321
    %v335 = vmul.f32 %v315, %v325
    %v336 = vmul.f32 %v314, %v329
    %v337 = vmul.f32 %v317, %v333
    %vm338 = vcmask 588800
    %v340 = vsel %vm338, %v70, 0
    %v343 = vsel %vm338, %v71, 0
    %345 = vmatprep.subr.mxu0 0.0
    %346 = vmatpush1.msra.mxu0 0.0
    %347 = vmatprep.subr.mxu0 0.0
    %348 = vmatpush1.msra.mxu0 0.0
    %349 = vmatprep.subr.mxu0 0.0
    %350 = vmatpush1.msra.mxu0 0.0
    %351 = vmatprep.subr.mxu0 0.0
    %352 = vmatpush1.msra.mxu0 0.0
    %353 = vmatprep.subr.mxu0 0.0
    %354 = vmatpush1.msra.mxu0 0.0
    %355 = vmatprep.subr.mxu0 0.0
    %356 = vmatpush1.msra.mxu0 0.0
    %357 = vmatprep.subr.mxu0 0.0
    %358 = vmatpush1.msra.mxu0 0.0
    %359 = vmatprep.subr.mxu0 %v335
    %360 = vmatpush1.msra.mxu0 %v334
    %361 = vmatprep.subr.mxu0 %v302
    %362 = vmatpush1.msra.mxu0 %v301
    %363 = vmatprep.subr.mxu0 %v269
    %364 = vmatpush1.msra.mxu0 %v268
    %365 = vmatprep.subr.mxu0 %v236
    %366 = vmatpush1.msra.mxu0 %v235
    %367 = vmatprep.subr.mxu0 %v67
    %368 = vmatpush1.msra.mxu0 %v66
    %369 = vmatprep.subr.mxu0 %v203
    %370 = vmatpush1.msra.mxu0 %v202
    %371 = vmatprep.subr.mxu0 %v170
    %372 = vmatpush1.msra.mxu0 %v169
    %373 = vmatprep.subr.mxu0 %v137
    %374 = vmatpush1.msra.mxu0 %v136
    %375 = vmatprep.subr.mxu0 %v104
    %376 = vmatpush1.msra.mxu0 %v103
    %377 = vmatprep.subr.mxu0 0.0
    %378 = vmatpush2.msra.mxu0 0.0
    %379 = vmatprep.subr.mxu0 0.0
    %380 = vmatpush2.msra.mxu0 0.0
    %381 = vmatprep.subr.mxu0 0.0
    %382 = vmatpush2.msra.mxu0 0.0
    %383 = vmatprep.subr.mxu0 0.0
    %384 = vmatpush2.msra.mxu0 0.0
    %385 = vmatprep.subr.mxu0 0.0
    %386 = vmatpush2.msra.mxu0 0.0
    %387 = vmatprep.subr.mxu0 0.0
    %388 = vmatpush2.msra.mxu0 0.0
    %389 = vmatprep.subr.mxu0 0.0
    %390 = vmatpush2.msra.mxu0 0.0
    %391 = vmatprep.subr.mxu0 0.0
    %392 = vmatpush2.msra.mxu0 0.0
    %393 = vmatprep.subr.mxu0 0.0
    %394 = vmatpush2.msra.mxu0 0.0
    %395 = vmatprep.subr.mxu0 0.0
    %396 = vmatpush2.msra.mxu0 0.0
    %397 = vmatprep.subr.mxu0 0.0
    %398 = vmatpush2.msra.mxu0 0.0
    %399 = vmatprep.subr.mxu0 0.0
    %400 = vmatpush2.msra.mxu0 0.0
    %401 = vmatprep.subr.mxu0 0.0
    %402 = vmatpush2.msra.mxu0 0.0
    %403 = vmatprep.subr.mxu0 0.0
    %404 = vmatpush2.msra.mxu0 0.0
    %405 = vmatprep.subr.mxu0 0.0
    %406 = vmatpush2.msra.mxu0 0.0
    %407 = vmatprep.subr.mxu0 0.0
    %408 = vmatpush2.msra.mxu0 0.0
    %409 = vmatprep.mubr.f32.mxu0 0.0
    %410 = vmatmul.mubr.f32.gmra.mxu0 %v340
    %v411 = vpop.f32.mrf.mxu0
    %v412 = vadd.f32 0.0, %v411
    %v413 = vpop.f32.mrf.mxu0
    %v414 = vadd.f32 0.0, %v413
    %415 = vmatprep.mubr.f32.mxu0 0.0
    %416 = vmatmul.mubr.f32.gmra.mxu0 %v343
    %v417 = vpop.f32.mrf.mxu0
    %v418 = vadd.f32 0.0, %v417
    %v419 = vpop.f32.mrf.mxu0
    %v420 = vadd.f32 0.0, %v419
    %421 = vdwg.mxu0
    %422 = vmatprep.subr.mxu0 0.0
    %423 = vmatpush1.msra.mxu0 0.0
    %424 = vmatprep.subr.mxu0 0.0
    %425 = vmatpush1.msra.mxu0 0.0
    %426 = vmatprep.subr.mxu0 0.0
    %427 = vmatpush1.msra.mxu0 0.0
    %428 = vmatprep.subr.mxu0 0.0
    %429 = vmatpush1.msra.mxu0 0.0
    %430 = vmatprep.subr.mxu0 0.0
    %431 = vmatpush1.msra.mxu0 0.0
    %432 = vmatprep.subr.mxu0 0.0
    %433 = vmatpush1.msra.mxu0 0.0
    %434 = vmatprep.subr.mxu0 0.0
    %435 = vmatpush1.msra.mxu0 0.0
    %436 = vmatprep.subr.mxu0 %v337
    %437 = vmatpush1.msra.mxu0 %v336
    %438 = vmatprep.subr.mxu0 %v304
    %439 = vmatpush1.msra.mxu0 %v303
    %440 = vmatprep.subr.mxu0 %v271
    %441 = vmatpush1.msra.mxu0 %v270
    %442 = vmatprep.subr.mxu0 %v238
    %443 = vmatpush1.msra.mxu0 %v237
    %444 = vmatprep.subr.mxu0 %v69
    %445 = vmatpush1.msra.mxu0 %v68
    %446 = vmatprep.subr.mxu0 %v205
    %447 = vmatpush1.msra.mxu0 %v204
    %448 = vmatprep.subr.mxu0 %v172
    %449 = vmatpush1.msra.mxu0 %v171
    %450 = vmatprep.subr.mxu0 %v139
    %451 = vmatpush1.msra.mxu0 %v138
    %452 = vmatprep.subr.mxu0 %v106
    %453 = vmatpush1.msra.mxu0 %v105
    %454 = vmatprep.subr.mxu0 0.0
    %455 = vmatpush2.msra.mxu0 0.0
    %456 = vmatprep.subr.mxu0 0.0
    %457 = vmatpush2.msra.mxu0 0.0
    %458 = vmatprep.subr.mxu0 0.0
    %459 = vmatpush2.msra.mxu0 0.0
    %460 = vmatprep.subr.mxu0 0.0
    %461 = vmatpush2.msra.mxu0 0.0
    %462 = vmatprep.subr.mxu0 0.0
    %463 = vmatpush2.msra.mxu0 0.0
    %464 = vmatprep.subr.mxu0 0.0
    %465 = vmatpush2.msra.mxu0 0.0
    %466 = vmatprep.subr.mxu0 0.0
    %467 = vmatpush2.msra.mxu0 0.0
    %468 = vmatprep.subr.mxu0 0.0
    %469 = vmatpush2.msra.mxu0 0.0
    %470 = vmatprep.subr.mxu0 0.0
    %471 = vmatpush2.msra.mxu0 0.0
    %472 = vmatprep.subr.mxu0 0.0
    %473 = vmatpush2.msra.mxu0 0.0
    %474 = vmatprep.subr.mxu0 0.0
    %475 = vmatpush2.msra.mxu0 0.0
    %476 = vmatprep.subr.mxu0 0.0
    %477 = vmatpush2.msra.mxu0 0.0
    %478 = vmatprep.subr.mxu0 0.0
    %479 = vmatpush2.msra.mxu0 0.0
    %480 = vmatprep.subr.mxu0 0.0
    %481 = vmatpush2.msra.mxu0 0.0
    %482 = vmatprep.subr.mxu0 0.0
    %483 = vmatpush2.msra.mxu0 0.0
    %484 = vmatprep.subr.mxu0 0.0
    %485 = vmatpush2.msra.mxu0 0.0
    %486 = vmatprep.mubr.f32.mxu0 0.0
    %487 = vmatmul.mubr.f32.gmra.mxu0 %v340
    %v488 = vpop.f32.mrf.mxu0
    %v489 = vadd.f32 0.0, %v488
    %v490 = vpop.f32.mrf.mxu0
    %v491 = vadd.f32 0.0, %v490
    %492 = vmatprep.mubr.f32.mxu0 0.0
    %493 = vmatmul.mubr.f32.gmra.mxu0 %v343
    %v494 = vpop.f32.mrf.mxu0
    %v495 = vadd.f32 0.0, %v494
    %v496 = vpop.f32.mrf.mxu0
    %v497 = vadd.f32 0.0, %v496
    %498 = vdwg.mxu0
    %v499 = vld [vmem:[%s3] sm:$0xff]
    %v500 = vld [vmem:[%s3 + $0x8] sm:$0xff]
    %v501 = vadd.f32 %v412, %v414
    %502 = vadd.xlane.f32.xlu0 %v501
    %v503 = vpop.xlane.xlu0 %502
    %v504 = vadd.f32 %v418, %v420
    %505 = vadd.xlane.f32.xlu0 %v504
    %v506 = vpop.xlane.xlu0 %505
    %v507 = vmul.f32 %v503, 0.00390625
    %v508 = vmul.f32 %v506, 0.00390625
    %v509 = vsub.f32 %v412, %v507
    %v510 = vsub.f32 %v414, %v507
    %v511 = vsub.f32 %v418, %v508
    %v512 = vsub.f32 %v420, %v508
    %v513 = vmul.f32 %v509, %v509
    %v514 = vmul.f32 %v510, %v510
    %v515 = vmul.f32 %v511, %v511
    %v516 = vmul.f32 %v512, %v512
    %v517 = vadd.f32 %v513, %v514
    %518 = vadd.xlane.f32.xlu0 %v517
    %v519 = vpop.xlane.xlu0 %518
    %v520 = vadd.f32 %v515, %v516
    %521 = vadd.xlane.f32.xlu0 %v520
    %v522 = vpop.xlane.xlu0 %521
    %v523 = vmul.f32 %v519, 0.00390625
    %v524 = vmul.f32 %v522, 0.00390625
    %v525 = vadd.f32 %v523, 1e-05
    %v526 = vadd.f32 %v524, 1e-05
    %v527 = vrsqrt.pop %v525
    %v528 = vrsqrt.pop %v526
    %v529 = vmul.f32 %v499, %v527
    %v530 = vmul.f32 %v500, %v528
    %532 = vset.pattern.permute.xlu0 0
    %533 = vperm.xlu0 %532, %v529
    %v534 = vpop.permute.xlu0 %533
    %537 = vset.pattern.permute.xlu0 0
    %538 = vperm.xlu0 %537, %v530
    %v539 = vpop.permute.xlu0 %538
    %v541 = vmul.f32 %v509, %v534
    %v542 = vmul.f32 %v510, %v534
    %v543 = vmul.f32 %v511, %v539
    %v544 = vmul.f32 %v512, %v539
    %546 = vset.pattern.permute.xlu0 1
    %547 = vperm.xlu0 %546, %v499
    %v548 = vpop.permute.xlu0 %547
    %551 = vset.pattern.permute.xlu0 1
    %552 = vperm.xlu0 %551, %v500
    %v553 = vpop.permute.xlu0 %552
    %v555 = vadd.f32 %v541, %v548
    %v556 = vadd.f32 %v542, %v548
    %v557 = vadd.f32 %v543, %v553
    %v558 = vadd.f32 %v544, %v553
    %v559 = vadd.f32 %v489, %v491
    %560 = vadd.xlane.f32.xlu0 %v559
    %v561 = vpop.xlane.xlu0 %560
    %v562 = vadd.f32 %v495, %v497
    %563 = vadd.xlane.f32.xlu0 %v562
    %v564 = vpop.xlane.xlu0 %563
    %v565 = vmul.f32 %v561, 0.00390625
    %v566 = vmul.f32 %v564, 0.00390625
    %v567 = vsub.f32 %v489, %v565
    %v568 = vsub.f32 %v491, %v565
    %v569 = vsub.f32 %v495, %v566
    %v570 = vsub.f32 %v497, %v566
    %v571 = vmul.f32 %v567, %v567
    %v572 = vmul.f32 %v568, %v568
    %v573 = vmul.f32 %v569, %v569
    %v574 = vmul.f32 %v570, %v570
    %v575 = vadd.f32 %v571, %v572
    %576 = vadd.xlane.f32.xlu0 %v575
    %v577 = vpop.xlane.xlu0 %576
    %v578 = vadd.f32 %v573, %v574
    %579 = vadd.xlane.f32.xlu0 %v578
    %v580 = vpop.xlane.xlu0 %579
    %v581 = vmul.f32 %v577, 0.00390625
    %v582 = vmul.f32 %v580, 0.00390625
    %v583 = vadd.f32 %v581, 1e-05
    %v584 = vadd.f32 %v582, 1e-05
    %v585 = vrsqrt.pop %v583
    %v586 = vrsqrt.pop %v584
    %v587 = vmul.f32 %v499, %v585
    %v588 = vmul.f32 %v500, %v586
    %590 = vset.pattern.permute.xlu0 0
    %591 = vperm.xlu0 %590, %v587
    %v592 = vpop.permute.xlu0 %591
    %595 = vset.pattern.permute.xlu0 0
    %596 = vperm.xlu0 %595, %v588
    %v597 = vpop.permute.xlu0 %596
    %v599 = vmul.f32 %v567, %v592
    %v600 = vmul.f32 %v568, %v592
    %v601 = vmul.f32 %v569, %v597
    %v602 = vmul.f32 %v570, %v597
    %v603 = vadd.f32 %v599, %v548
    %v604 = vadd.f32 %v600, %v548
    %v605 = vadd.f32 %v601, %v553
    %v606 = vadd.f32 %v602, %v553
    %vm607 = vcmp.ge.f32.partialorder %v555, 0.0
    %vm608 = vcmp.ge.f32.partialorder %v556, 0.0
    %vm609 = vcmp.ge.f32.partialorder %v603, 0.0
    %vm610 = vcmp.ge.f32.partialorder %v604, 0.0
    %v611 = vmul.f32 %v555, 0.01
    %v612 = vmul.f32 %v556, 0.01
    %v613 = vmul.f32 %v603, 0.01
    %v614 = vmul.f32 %v604, 0.01
    %v615 = vsel %vm607, %v555, %v611
    %v616 = vsel %vm608, %v556, %v612
    %v617 = vsel %vm609, %v603, %v613
    %v618 = vsel %vm610, %v604, %v614
    %v619 = vld [vmem:[#allocation5] sm:$0xff]
    %620 = vrot.lane.b32.xlu0 %v615, 17
    %v621 = vpop.permute.xlu0 %620
    %622 = vrot.lane.b32.xlu0 %v616, 17
    %v623 = vpop.permute.xlu0 %622
    %624 = vrot.lane.b32.xlu0 %v617, 17
    %v625 = vpop.permute.xlu0 %624
    %626 = vrot.lane.b32.xlu0 %v618, 17
    %v627 = vpop.permute.xlu0 %626
    %v628 = vsel %vm82, %v625, %v627
    %v629 = vsel %vm82, %v623, %v625
    %v630 = vsel %vm82, %v621, %v623
    %v631 = vsel %vm82, %v627, %v621
    %v632 = vmul.f32 %v631, %v90
    %v633 = vmul.f32 %v630, %v94
    %v634 = vmul.f32 %v629, %v98
    %v635 = vmul.f32 %v628, %v102
    %636 = vrot.lane.b32.xlu0 %v615, 16
    %v637 = vpop.permute.xlu0 %636
    %638 = vrot.lane.b32.xlu0 %v616, 16
    %v639 = vpop.permute.xlu0 %638
    %640 = vrot.lane.b32.xlu0 %v617, 16
    %v641 = vpop.permute.xlu0 %640
    %642 = vrot.lane.b32.xlu0 %v618, 16
    %v643 = vpop.permute.xlu0 %642
    %v644 = vsel %vm115, %v641, %v643
    %v645 = vsel %vm115, %v639, %v641
    %v646 = vsel %vm115, %v637, %v639
    %v647 = vsel %vm115, %v643, %v637
    %v648 = vmul.f32 %v647, %v123
    %v649 = vmul.f32 %v646, %v127
    %v650 = vmul.f32 %v645, %v131
    %v651 = vmul.f32 %v644, %v135
    %652 = vrot.lane.b32.xlu0 %v615, 15
    %v653 = vpop.permute.xlu0 %652
    %654 = vrot.lane.b32.xlu0 %v616, 15
    %v655 = vpop.permute.xlu0 %654
    %656 = vrot.lane.b32.xlu0 %v617, 15
    %v657 = vpop.permute.xlu0 %656
    %658 = vrot.lane.b32.xlu0 %v618, 15
    %v659 = vpop.permute.xlu0 %658
    %v660 = vsel %vm148, %v657, %v659
    %v661 = vsel %vm148, %v655, %v657
    %v662 = vsel %vm148, %v653, %v655
    %v663 = vsel %vm148, %v659, %v653
    %v664 = vmul.f32 %v663, %v156
    %v665 = vmul.f32 %v662, %v160
    %v666 = vmul.f32 %v661, %v164
    %v667 = vmul.f32 %v660, %v168
    %668 = vrot.lane.b32.xlu0 %v615, 1
    %v669 = vpop.permute.xlu0 %668
    %670 = vrot.lane.b32.xlu0 %v616, 1
    %v671 = vpop.permute.xlu0 %670
    %672 = vrot.lane.b32.xlu0 %v617, 1
    %v673 = vpop.permute.xlu0 %672
    %674 = vrot.lane.b32.xlu0 %v618, 1
    %v675 = vpop.permute.xlu0 %674
    %v676 = vsel %vm181, %v673, %v675
    %v677 = vsel %vm181, %v671, %v673
    %v678 = vsel %vm181, %v669, %v671
    %v679 = vsel %vm181, %v675, %v669
    %v680 = vmul.f32 %v679, %v189
    %v681 = vmul.f32 %v678, %v193
    %v682 = vmul.f32 %v677, %v197
    %v683 = vmul.f32 %v676, %v201
    %684 = vrot.lane.b32.xlu0 %v615, 127
    %v685 = vpop.permute.xlu0 %684
    %686 = vrot.lane.b32.xlu0 %v616, 127
    %v687 = vpop.permute.xlu0 %686
    %688 = vrot.lane.b32.xlu0 %v617, 127
    %v689 = vpop.permute.xlu0 %688
    %690 = vrot.lane.b32.xlu0 %v618, 127
    %v691 = vpop.permute.xlu0 %690
    %v692 = vsel %vm214, %v689, %v691
    %v693 = vsel %vm214, %v687, %v689
    %v694 = vsel %vm214, %v685, %v687
    %v695 = vsel %vm214, %v691, %v685
    %v696 = vmul.f32 %v694, %v222
    %v697 = vmul.f32 %v693, %v226
    %v698 = vmul.f32 %v692, %v230
    %v699 = vmul.f32 %v695, %v234
    %700 = vrot.lane.b32.xlu0 %v615, 113
    %v701 = vpop.permute.xlu0 %700
    %702 = vrot.lane.b32.xlu0 %v616, 113
    %v703 = vpop.permute.xlu0 %702
    %704 = vrot.lane.b32.xlu0 %v617, 113
    %v705 = vpop.permute.xlu0 %704
    %706 = vrot.lane.b32.xlu0 %v618, 113
    %v707 = vpop.permute.xlu0 %706
    %v708 = vsel %vm247, %v705, %v707
    %v709 = vsel %vm247, %v703, %v705
    %v710 = vsel %vm247, %v701, %v703
    %v711 = vsel %vm247, %v707, %v701
    %v712 = vmul.f32 %v710, %v255
    %v713 = vmul.f32 %v709, %v259
    %v714 = vmul.f32 %v708, %v263
    %v715 = vmul.f32 %v711, %v267
    %716 = vrot.lane.b32.xlu0 %v615, 112
    %v717 = vpop.permute.xlu0 %716
    %718 = vrot.lane.b32.xlu0 %v616, 112
    %v719 = vpop.permute.xlu0 %718
    %720 = vrot.lane.b32.xlu0 %v617, 112
    %v721 = vpop.permute.xlu0 %720
    %722 = vrot.lane.b32.xlu0 %v618, 112
    %v723 = vpop.permute.xlu0 %722
    %v724 = vsel %vm280, %v721, %v723
    %v725 = vsel %vm280, %v719, %v721
    %v726 = vsel %vm280, %v717, %v719
    %v727 = vsel %vm280, %v723, %v717
    %v728 = vmul.f32 %v726, %v288
    %v729 = vmul.f32 %v725, %v292
    %v730 = vmul.f32 %v724, %v296
    %v731 = vmul.f32 %v727, %v300
    %732 = vrot.lane.b32.xlu0 %v615, 111
    %v733 = vpop.permute.xlu0 %732
    %734 = vrot.lane.b32.xlu0 %v616, 111
    %v735 = vpop.permute.xlu0 %734
    %736 = vrot.lane.b32.xlu0 %v617, 111
    %v737 = vpop.permute.xlu0 %736
    %738 = vrot.lane.b32.xlu0 %v618, 111
    %v739 = vpop.permute.xlu0 %738
    %v740 = vsel %vm313, %v737, %v739
    %v741 = vsel %vm313, %v735, %v737
    %v742 = vsel %vm313, %v733, %v735
    %v743 = vsel %vm313, %v739, %v733
    %v744 = vmul.f32 %v742, %v321
    %v745 = vmul.f32 %v741, %v325
    %v746 = vmul.f32 %v740, %v329
    %v747 = vmul.f32 %v743, %v333
    %v749 = vsel %vm338, %v619, 0
    %751 = vmatprep.subr.mxu0 0.0
    %752 = vmatpush1.msra.mxu0 0.0
    %753 = vmatprep.subr.mxu0 0.0
    %754 = vmatpush1.msra.mxu0 0.0
    %755 = vmatprep.subr.mxu0 0.0
    %756 = vmatpush1.msra.mxu0 0.0
    %757 = vmatprep.subr.mxu0 0.0
    %758 = vmatpush1.msra.mxu0 0.0
    %759 = vmatprep.subr.mxu0 0.0
    %760 = vmatpush1.msra.mxu0 0.0
    %761 = vmatprep.subr.mxu0 0.0
    %762 = vmatpush1.msra.mxu0 0.0
    %763 = vmatprep.subr.mxu0 0.0
    %764 = vmatpush1.msra.mxu0 0.0
    %765 = vmatprep.subr.mxu0 %v745
    %766 = vmatpush1.msra.mxu0 %v744
    %767 = vmatprep.subr.mxu0 %v729
    %768 = vmatpush1.msra.mxu0 %v728
    %769 = vmatprep.subr.mxu0 %v713
    %770 = vmatpush1.msra.mxu0 %v712
    %771 = vmatprep.subr.mxu0 %v697
    %772 = vmatpush1.msra.mxu0 %v696
    %773 = vmatprep.subr.mxu0 %v616
    %774 = vmatpush1.msra.mxu0 %v615
    %775 = vmatprep.subr.mxu0 %v681
    %776 = vmatpush1.msra.mxu0 %v680
    %777 = vmatprep.subr.mxu0 %v665
    %778 = vmatpush1.msra.mxu0 %v664
    %779 = vmatprep.subr.mxu0 %v649
    %780 = vmatpush1.msra.mxu0 %v648
    %781 = vmatprep.subr.mxu0 %v633
    %782 = vmatpush1.msra.mxu0 %v632
    %783 = vmatprep.subr.mxu0 0.0
    %784 = vmatpush2.msra.mxu0 0.0
    %785 = vmatprep.subr.mxu0 0.0
    %786 = vmatpush2.msra.mxu0 0.0
    %787 = vmatprep.subr.mxu0 0.0
    %788 = vmatpush2.msra.mxu0 0.0
    %789 = vmatprep.subr.mxu0 0.0
    %790 = vmatpush2.msra.mxu0 0.0
    %791 = vmatprep.subr.mxu0 0.0
    %792 = vmatpush2.msra.mxu0 0.0
    %793 = vmatprep.subr.mxu0 0.0
    %794 = vmatpush2.msra.mxu0 0.0
    %795 = vmatprep.subr.mxu0 0.0
    %796 = vmatpush2.msra.mxu0 0.0
    %797 = vmatprep.subr.mxu0 0.0
    %798 = vmatpush2.msra.mxu0 0.0
    %799 = vmatprep.subr.mxu0 0.0
    %800 = vmatpush2.msra.mxu0 0.0
    %801 = vmatprep.subr.mxu0 0.0
    %802 = vmatpush2.msra.mxu0 0.0
    %803 = vmatprep.subr.mxu0 0.0
    %804 = vmatpush2.msra.mxu0 0.0
    %805 = vmatprep.subr.mxu0 0.0
    %806 = vmatpush2.msra.mxu0 0.0
    %807 = vmatprep.subr.mxu0 0.0
    %808 = vmatpush2.msra.mxu0 0.0
    %809 = vmatprep.subr.mxu0 0.0
    %810 = vmatpush2.msra.mxu0 0.0
    %811 = vmatprep.subr.mxu0 0.0
    %812 = vmatpush2.msra.mxu0 0.0
    %813 = vmatprep.subr.mxu0 0.0
    %814 = vmatpush2.msra.mxu0 0.0
    %815 = vmatprep.mubr.f32.mxu0 0.0
    %816 = vmatmul.mubr.f32.gmra.mxu0 %v749
    %v817 = vpop.f32.mrf.mxu0
    %v818 = vadd.f32 0.0, %v817
    %v819 = vpop.f32.mrf.mxu0
    %v820 = vadd.f32 0.0, %v819
    %821 = vdwg.mxu0
    %822 = vmatprep.subr.mxu0 0.0
    %823 = vmatpush1.msra.mxu0 0.0
    %824 = vmatprep.subr.mxu0 0.0
    %825 = vmatpush1.msra.mxu0 0.0
    %826 = vmatprep.subr.mxu0 0.0
    %827 = vmatpush1.msra.mxu0 0.0
    %828 = vmatprep.subr.mxu0 0.0
    %829 = vmatpush1.msra.mxu0 0.0
    %830 = vmatprep.subr.mxu0 0.0
    %831 = vmatpush1.msra.mxu0 0.0
    %832 = vmatprep.subr.mxu0 0.0
    %833 = vmatpush1.msra.mxu0 0.0
    %834 = vmatprep.subr.mxu0 0.0
    %835 = vmatpush1.msra.mxu0 0.0
    %836 = vmatprep.subr.mxu0 %v747
    %837 = vmatpush1.msra.mxu0 %v746
    %838 = vmatprep.subr.mxu0 %v731
    %839 = vmatpush1.msra.mxu0 %v730
    %840 = vmatprep.subr.mxu0 %v715
    %841 = vmatpush1.msra.mxu0 %v714
    %842 = vmatprep.subr.mxu0 %v699
    %843 = vmatpush1.msra.mxu0 %v698
    %844 = vmatprep.subr.mxu0 %v618
    %845 = vmatpush1.msra.mxu0 %v617
    %846 = vmatprep.subr.mxu0 %v683
    %847 = vmatpush1.msra.mxu0 %v682
    %848 = vmatprep.subr.mxu0 %v667
    %849 = vmatpush1.msra.mxu0 %v666
    %850 = vmatprep.subr.mxu0 %v651
    %851 = vmatpush1.msra.mxu0 %v650
    %852 = vmatprep.subr.mxu0 %v635
    %853 = vmatpush1.msra.mxu0 %v634
    %854 = vmatprep.subr.mxu0 0.0
    %855 = vmatpush2.msra.mxu0 0.0
    %856 = vmatprep.subr.mxu0 0.0
    %857 = vmatpush2.msra.mxu0 0.0
    %858 = vmatprep.subr.mxu0 0.0
    %859 = vmatpush2.msra.mxu0 0.0
    %860 = vmatprep.subr.mxu0 0.0
    %861 = vmatpush2.msra.mxu0 0.0
    %862 = vmatprep.subr.mxu0 0.0
    %863 = vmatpush2.msra.mxu0 0.0
    %864 = vmatprep.subr.mxu0 0.0
    %865 = vmatpush2.msra.mxu0 0.0
    %866 = vmatprep.subr.mxu0 0.0
    %867 = vmatpush2.msra.mxu0 0.0
    %868 = vmatprep.subr.mxu0 0.0
    %869 = vmatpush2.msra.mxu0 0.0
    %870 = vmatprep.subr.mxu0 0.0
    %871 = vmatpush2.msra.mxu0 0.0
    %872 = vmatprep.subr.mxu0 0.0
    %873 = vmatpush2.msra.mxu0 0.0
    %874 = vmatprep.subr.mxu0 0.0
    %875 = vmatpush2.msra.mxu0 0.0
    %876 = vmatprep.subr.mxu0 0.0
    %877 = vmatpush2.msra.mxu0 0.0
    %878 = vmatprep.subr.mxu0 0.0
    %879 = vmatpush2.msra.mxu0 0.0
    %880 = vmatprep.subr.mxu0 0.0
    %881 = vmatpush2.msra.mxu0 0.0
    %882 = vmatprep.subr.mxu0 0.0
    %883 = vmatpush2.msra.mxu0 0.0
    %884 = vmatprep.subr.mxu0 0.0
    %885 = vmatpush2.msra.mxu0 0.0
    %886 = vmatprep.mubr.f32.mxu0 0.0
    %887 = vmatmul.mubr.f32.gmra.mxu0 %v749
    %v888 = vpop.f32.mrf.mxu0
    %v889 = vadd.f32 0.0, %v888
    %v890 = vpop.f32.mrf.mxu0
    %v891 = vadd.f32 0.0, %v890
    %892 = vdwg.mxu0
    %v893 = vld [vmem:[%s3] sm:$0xff]
    %v894 = vadd.f32 %v818, %v820
    %895 = vadd.xlane.f32.xlu0 %v894
    %v896 = vpop.xlane.xlu0 %895
    %v897 = vmul.f32 %v896, 0.00390625
    %v898 = vsub.f32 %v818, %v897
    %v899 = vsub.f32 %v820, %v897
    %v900 = vmul.f32 %v898, %v898
    %v901 = vmul.f32 %v899, %v899
    %v902 = vadd.f32 %v900, %v901
    %903 = vadd.xlane.f32.xlu0 %v902
    %v904 = vpop.xlane.xlu0 %903
    %v905 = vmul.f32 %v904, 0.00390625
    %v906 = vadd.f32 %v905, 1e-05
    %v907 = vrsqrt.pop %v906
    %v908 = vmul.f32 %v893, %v907
    %910 = vset.pattern.permute.xlu0 2
    %911 = vperm.xlu0 %910, %v908
    %v912 = vpop.permute.xlu0 %911
    %v914 = vmul.f32 %v898, %v912
    %v915 = vmul.f32 %v899, %v912
    %917 = vset.pattern.permute.xlu0 3
    %918 = vperm.xlu0 %917, %v893
    %v919 = vpop.permute.xlu0 %918
    %v921 = vadd.f32 %v914, %v919
    %v922 = vadd.f32 %v915, %v919
    %v923 = vadd.f32 %v889, %v891
    %924 = vadd.xlane.f32.xlu0 %v923
    %v925 = vpop.xlane.xlu0 %924
    %v926 = vmul.f32 %v925, 0.00390625
    %v927 = vsub.f32 %v889, %v926
    %v928 = vsub.f32 %v891, %v926
    %v929 = vmul.f32 %v927, %v927
    %v930 = vmul.f32 %v928, %v928
    %v931 = vadd.f32 %v929, %v930
    %932 = vadd.xlane.f32.xlu0 %v931
    %v933 = vpop.xlane.xlu0 %932
    %v934 = vmul.f32 %v933, 0.00390625
    %v935 = vadd.f32 %v934, 1e-05
    %v936 = vrsqrt.pop %v935
    %v937 = vmul.f32 %v893, %v936
    %939 = vset.pattern.permute.xlu0 2
    %940 = vperm.xlu0 %939, %v937
    %v941 = vpop.permute.xlu0 %940
    %v943 = vmul.f32 %v927, %v941
    %v944 = vmul.f32 %v928, %v941
    %v945 = vadd.f32 %v943, %v919
    %v946 = vadd.f32 %v944, %v919
    %v947 = vadd.f32 %v921, %v557
    %v948 = vadd.f32 %v922, %v558
    %v949 = vadd.f32 %v945, %v605
    %v950 = vadd.f32 %v946, %v606
    %vm951 = vcmp.ge.f32.partialorder %v947, 0.0
    %vm952 = vcmp.ge.f32.partialorder %v948, 0.0
    %vm953 = vcmp.ge.f32.partialorder %v949, 0.0
    %vm954 = vcmp.ge.f32.partialorder %v950, 0.0
    %v955 = vmul.f32 %v947, 0.01
    %v956 = vmul.f32 %v948, 0.01
    %v957 = vmul.f32 %v949, 0.01
    %v958 = vmul.f32 %v950, 0.01
    %v959 = vsel %vm951, %v947, %v955
    %v960 = vsel %vm952, %v948, %v956
    %v961 = vsel %vm953, %v949, %v957
    %v962 = vsel %vm954, %v950, %v958
    %963 = vst [vmem:[#allocation8] sm:$0xff] %v959
    %964 = vst [vmem:[#allocation8 + $0x8] sm:$0xff] %v960
    %965 = vst [vmem:[#allocation8 + $0x10] sm:$0xff] %v961
    %966 = vst [vmem:[#allocation8 + $0x18] sm:$0xff] %v962
    // Predicated region
    $region34: #{tpu_custom_call.1} parent=1 // pred_check
      _
    $region35: #{tpu_custom_call.1} parent=1 // pred_check_branch
      %968 = sbr.rel (0) target = $region37
    $region36: #{tpu_custom_call.1} parent=1 // pred_region
      %s970 = ssub.s32 512, 512
      %971 = vsyncadd [#allocation4], %s970
      %s973 = sshll.u32 [#allocation8], 4
      %s974 = int_to_ptr.vmem [resolvable:$true] %s973
      %976 = dma.vmem_to_hbm [thread:$0]  %s974, 512, %s5, [#allocation4]
    $region37: #{tpu_custom_call.1} parent=1 // pred_fallthru
      _
    // Predicated region
    $region38: #{tpu_custom_call.1} parent=1 // pred_check
      _
    $region39: #{tpu_custom_call.1} parent=1 // pred_check_branch
      %978 = sbr.rel (0) target = $region41
    $region40: #{tpu_custom_call.1} parent=1 // pred_region
      %979 = dma.done [#allocation4], 512
    $region41: #{tpu_custom_call.1} parent=1 // pred_fallthru
      _
    %980 = vsyncpa [#allocation3], 1
    %981 = vsyncpa [#allocation6], 1
    %982 = vsyncpa [#allocation4], 1

</llo_original>
